<compile_context>
chip_gen: v5e
topology: v5e:2x2
jax: 0.10.0
libtpu: 0.0.40
codegen_flags: <defaults>
</compile_context>

<pallas_src>
import functools

import jax
import jax.numpy as jnp
from jax.experimental import pallas as pl
from jax.experimental.pallas import tpu as pltpu


# ----------------------------------------------------------------------------
# Small host-side helpers
# ----------------------------------------------------------------------------
def _round_up(v, m):
    return (v + m - 1) // m * m


@functools.lru_cache(maxsize=None)
def _roll_follows_jnp_convention() -> bool:
    """Probe pltpu.roll's direction once so the tap shifts are always correct.

    jnp.roll convention: out[i] = x[(i - shift) % L].
    """
    def _probe(x_ref, o_ref):
        o_ref[...] = pltpu.roll(x_ref[...], 1, 1)

    x = jnp.tile(jax.lax.iota(jnp.float32, 128).reshape(1, 128), (8, 1))
    y = pl.pallas_call(
        _probe, out_shape=jax.ShapeDtypeStruct((8, 128), jnp.float32))(x)
    return bool(abs(float(y[0, 1]) - 0.0) < 0.5)


def _vmem_limit_bytes():
    """Generation-aware VMEM budget (review #4): ~5/8 of capacity, capped."""
    cap = 128 * 1024 * 1024
    try:
        got = int(pltpu.get_tpu_info().vmem_capacity_bytes)
        if got > 0:
            cap = got
    except Exception:
        pass
    return max(32 * 1024 * 1024, min((cap * 5) // 8, 96 * 1024 * 1024))


def _choose_depth_tile(D, HW, cin_pad, cmid_pad, vmem_limit, batch):
    """Largest depth tile (divisor of D, lane-legal) whose bf16 im2col scratches
    fit ~1/3 of the VMEM budget, preferring >=4 total grid steps (v7x balance)."""
    budget = vmem_limit // 3

    def scratch_bytes(t):  # two bf16 patch scratches
        return 2 * 27 * (cin_pad * (t + 2) + cmid_pad * t) * HW

    cands = [t for t in range(1, D + 1)
             if D % t == 0 and (t == D or (t * HW) % 128 == 0)]
    fitting = [t for t in cands if scratch_bytes(t) <= budget] or [min(cands)]
    preferred = [t for t in fitting if batch * (D // t) >= 4]
    return max(preferred) if preferred else max(fitting)


def _pack_weight(w, cin_pad, cout_pad):
    """PyTorch conv weight (Cout, Cin, 3,3,3) -> (cout_pad, 27*cin_pad) bf16,
    columns ordered (kd, kh, kw, ci) to match the patch rows; padded channels 0."""
    cout, cin = w.shape[0], w.shape[1]
    w = jnp.transpose(w, (0, 2, 3, 4, 1))                    # (Cout, 3,3,3, Cin)
    w = jnp.pad(w, ((0, cout_pad - cout), (0, 0), (0, 0), (0, 0),
                    (0, cin_pad - cin)))
    return w.reshape(cout_pad, 27 * cin_pad).astype(jnp.bfloat16)


# ----------------------------------------------------------------------------
# Kernel
# ----------------------------------------------------------------------------
def _im2col(src, patches_ref, tap_masks, *, HW, W, keep, jnp_roll):
    """Write 27 shifted+masked copies of `src` (C, Lsrc) into the bf16 patch
    scratch (27*C, keep).  Tap (kd,kh,kw) is pltpu.roll of the whole slab by the
    static flat offset kd*HW + (kh-1)*W + (kw-1); out-of-volume / wrapped lanes
    are zeroed by the precomputed per-tap masks (the conv's zero padding)."""
    C, Lsrc = src.shape
    for kd in range(3):
        for kh in range(3):
            for kw in range(3):
                tap = kd * 9 + kh * 3 + kw
                delta = kd * HW + (kh - 1) * W + (kw - 1)
                shift = (-delta) % Lsrc if jnp_roll else delta % Lsrc
                rolled = src if shift == 0 else pltpu.roll(src, shift, 1)
                patches_ref[tap * C:(tap + 1) * C, :] = jnp.where(
                    tap_masks[tap], rolled[:, :keep], 0.0
                ).astype(patches_ref.dtype)


def _fused_conv_block_kernel(x_hbm, w1_ref, b1_ref, w2_ref, b2_ref, o_ref,
                             xslab_ref, p1_ref, p2_ref, dma_sem,
                             *, D, H, W, td, jnp_roll):
    """One (batch, depth-tile) step of conv3x3x3+ReLU -> conv3x3x3+ReLU (fused).

    x_hbm    : (N, Cin_p, (D+4)*HW) f32 in HBM (depth has a 2-voxel zero halo)
    w1/w2    : (Cmid_p, 27*Cin_p) / (Cout_p, 27*Cmid_p) bf16 im2col weights
    b1/b2    : (Cmid_p, 1) / (Cout_p, 1) f32
    o_ref    : (Cout_p, td*HW) f32 output tile (lane-dense stores)
    xslab_ref: (Cin_p, (td+4)*HW) f32 haloed input slab (manual DMA target)
    p1/p2    : bf16 im2col scratches, (27*Cin_p, (td+2)*HW) / (27*Cmid_p, td*HW)
    """
    HW = H * W
    SLAB = (td + 4) * HW          # input slab: output tile + 2-deep halo each side
    L1 = (td + 2) * HW            # conv1 activation slab: 1-deep halo each side
    L2 = td * HW                  # output tile
    n = pl.program_id(0)
    dt = pl.program_id(1)

    # ---- fetch the haloed input slab for this depth tile (HBM -> VMEM) -----
    # TODO(synk): double-buffer this DMA (prefetch tile dt+1) if it ever shows
    # up as exposed latency; it is a tiny fraction of the step's compute here.
    cp = pltpu.make_async_copy(
        x_hbm.at[n, :, pl.ds(dt * (td * HW), SLAB)], xslab_ref, dma_sem)
    cp.start()

    # ---- per-step boundary masks, hoisted out of the 27-tap loops ----------
    idx1 = jax.lax.broadcasted_iota(jnp.int32, (1, L1), 1)
    hh = (idx1 // W) % H
    ww = idx1 % W
    vh = [(hh >= 1 - kh) & (hh <= H - kh) for kh in range(3)]
    vw = [(ww >= 1 - kw) & (ww <= W - kw) for kw in range(3)]
    mhw = [[vh[kh] & vw[kw] for kw in range(3)] for kh in range(3)]

    idx2 = jax.lax.broadcasted_iota(jnp.int32, (1, L2), 1)
    d_out = dt * td + idx2 // HW                         # absolute output depth
    vdep = [(d_out + (kd - 1) >= 0) & (d_out + (kd - 1) < D) for kd in range(3)]

    # conv1 needs no depth mask (the wrapper's 2-voxel zero halo supplies it);
    # conv2's taps must be zero outside the real volume's depth range.
    masks1 = [mhw[kh][kw]
              for kd in range(3) for kh in range(3) for kw in range(3)]
    masks2 = [mhw[kh][kw][:, :L2] & vdep[kd]
              for kd in range(3) for kh in range(3) for kw in range(3)]

    cp.wait()
    x_slab = xslab_ref[...].astype(jnp.float32)          # (Cin_p, SLAB)

    # ---- conv1 + bias + ReLU: one fat-K MXU matmul --------------------------
    _im2col(x_slab, p1_ref, masks1, HW=HW, W=W, keep=L1, jnp_roll=jnp_roll)
    y = jnp.dot(w1_ref[...], p1_ref[...], preferred_element_type=jnp.float32)
    y = jnp.maximum(y + b1_ref[...], 0.0)                # (Cmid_p, L1) f32
    # Dropout3d(p=0.0) == identity.

    # ---- conv2 + bias + ReLU: one fat-K MXU matmul --------------------------
    _im2col(y, p2_ref, masks2, HW=HW, W=W, keep=L2, jnp_roll=jnp_roll)
    o = jnp.dot(w2_ref[...], p2_ref[...], preferred_element_type=jnp.float32)
    o = jnp.maximum(o + b2_ref[...], 0.0)                # (Cout_p, L2)
    o_ref[...] = o.astype(o_ref.dtype)
    # Dropout3d(p=0.0) == identity.


# ----------------------------------------------------------------------------
# Wrapper
# ----------------------------------------------------------------------------
@functools.partial(jax.jit, static_argnums=(2, 3, 4))
def _forward_jit(x, params, td, vmem_limit, jnp_roll):
    N, Cin, D, H, W = x.shape
    HW = H * W
    w1, b1, w2, b2 = params["w1"], params["b1"], params["w2"], params["b2"]
    Cmid, Cout = w1.shape[0], w2.shape[0]
    cin_p = _round_up(Cin, 8)
    cmid_p = _round_up(Cmid, 8)
    cout_p = _round_up(Cout, 8)
    assert D % td == 0
    n_dt = D // td

    # Pad channels to a sublane multiple (aligned patch stores, review #7) and
    # depth by the 2-voxel halo the fused conv pair needs; flatten D,H,W into
    # the lane axis (NCDHW-native: pure reshape, no transpose).
    x_p = jnp.pad(x, ((0, 0), (0, cin_p - Cin), (2, 2), (0, 0), (0, 0)))
    x_flat = x_p.reshape(N, cin_p, (D + 4) * HW)

    w1m = _pack_weight(w1, cin_p, cmid_p)                 # bf16 (review #2)
    w2m = _pack_weight(w2, cmid_p, cout_p)
    b1c = jnp.pad(b1, (0, cmid_p - Cmid)).reshape(cmid_p, 1).astype(jnp.float32)
    b2c = jnp.pad(b2, (0, cout_p - Cout)).reshape(cout_p, 1).astype(jnp.float32)

    kernel = functools.partial(_fused_conv_block_kernel,
                               D=D, H=H, W=W, td=td, jnp_roll=jnp_roll)
    out_flat = pl.pallas_call(
        kernel,
        out_shape=jax.ShapeDtypeStruct((N, cout_p, D * HW), x.dtype),
        grid=(N, n_dt),
        in_specs=[
            pl.BlockSpec(memory_space=pl.ANY),                         # x in HBM
            # NOTE: constant-index weight/bias blocks; pl.Buffered(1) would halve
            # their double-buffered VMEM at production channel counts.
            pl.BlockSpec((cmid_p, 27 * cin_p), lambda n, t: (0, 0)),   # W1
            pl.BlockSpec((cmid_p, 1), lambda n, t: (0, 0)),            # b1
            pl.BlockSpec((cout_p, 27 * cmid_p), lambda n, t: (0, 0)),  # W2
            pl.BlockSpec((cout_p, 1), lambda n, t: (0, 0)),            # b2
        ],
        out_specs=pl.BlockSpec((None, cout_p, td * HW), lambda n, t: (n, 0, t)),
        scratch_shapes=[
            pltpu.VMEM((cin_p, (td + 4) * HW), x.dtype),               # input slab
            pltpu.VMEM((27 * cin_p, (td + 2) * HW), jnp.bfloat16),     # conv1 im2col
            pltpu.VMEM((27 * cmid_p, td * HW), jnp.bfloat16),          # conv2 im2col
            pltpu.SemaphoreType.DMA,                                   # slab DMA sem
        ],
        compiler_params=pltpu.CompilerParams(
            dimension_semantics=("parallel", "parallel"),  # megacore on v7x
            vmem_limit_bytes=vmem_limit,
        ),
    )(x_flat, w1m, b1c, w2m, b2c)

    out = out_flat.reshape(N, cout_p, D, H, W)
    return out[:, :Cout]


def conv_block_forward(x_ncdhw, params):
    """Forward of Conv(batch_norm=False, dropout=False).

    x_ncdhw: (N, Cin, D, H, W) -> (N, Cout, D, H, W)   (PyTorch NCDHW layout)
    """
    jnp_roll = _roll_follows_jnp_convention()
    vmem_limit = _vmem_limit_bytes()
    N, Cin, D, H, W = x_ncdhw.shape
    Cmid, Cout = params["w1"].shape[0], params["w2"].shape[0]
    cin_p, cmid_p = _round_up(Cin, 8), _round_up(Cmid, 8)
    td = _choose_depth_tile(D, H * W, cin_p, cmid_p, vmem_limit, N)
    return _forward_jit(x_ncdhw, params, td, vmem_limit, jnp_roll)


# ----------------------------------------------------------------------------
# Params / reference / self-check
# ----------------------------------------------------------------------------
def init_conv_params(key, in_size, out_size):
    """Deterministic synthetic parameters, PyTorch Conv3d layout (O, I, 3, 3, 3)."""
    k1, k2, k3, k4 = jax.random.split(key, 4)
    s1 = 1.0 / (in_size * 27.0) ** 0.5
    s2 = 1.0 / (out_size * 27.0) ** 0.5
    return {
        "w1": jax.random.uniform(k1, (out_size, in_size, 3, 3, 3), jnp.float32, -s1, s1),
        "b1": jax.random.uniform(k2, (out_size,), jnp.float32, -s1, s1),
        "w2": jax.random.uniform(k3, (out_size, out_size, 3, 3, 3), jnp.float32, -s2, s2),
        "b2": jax.random.uniform(k4, (out_size,), jnp.float32, -s2, s2),
    }


def _reference_forward(x, params, *, mirror_bf16=True):
    """Plain-JAX reference (lax conv, NCDHW/OIDHW like PyTorch).

    With mirror_bf16=True the operands are rounded to bf16 exactly where the
    kernel rounds them (patches/weights/intermediate activation), so the only
    remaining difference is f32 accumulation order (~1e-6).  Against a pure-f32
    reference the bf16 operands cost ~1e-2 abs error (accuracy-budget choice)."""
    dn = ("NCDHW", "OIDHW", "NCDHW")
    hp = jax.lax.Precision.HIGHEST

    def cast(a):
        return a.astype(jnp.bfloat16).astype(jnp.float32) if mirror_bf16 else a

    y = jax.lax.conv_general_dilated(cast(x), cast(params["w1"]), (1, 1, 1),
                                     [(1, 1)] * 3, dimension_numbers=dn,
                                     precision=hp)
    y = jnp.maximum(y + params["b1"].reshape(1, -1, 1, 1, 1), 0.0)
    y = cast(y)
    o = jax.lax.conv_general_dilated(y, cast(params["w2"]), (1, 1, 1),
                                     [(1, 1)] * 3, dimension_numbers=dn,
                                     precision=hp)
    o = jnp.maximum(o + params["b2"].reshape(1, -1, 1, 1, 1), 0.0)
    return o


if __name__ == "__main__":
    key = jax.random.PRNGKey(0)
    k_x, k_p = jax.random.split(key)

    N, Cin, Cout, D, H, W = 2, 4, 8, 8, 16, 16
    x = jax.random.normal(k_x, (N, Cin, D, H, W), jnp.float32)   # NCDHW, like PyTorch
    params = init_conv_params(k_p, Cin, Cout)

    out = jax.block_until_ready(conv_block_forward(x, params))
    assert out.shape == (N, Cout, D, H, W)

    ref = _reference_forward(x, params, mirror_bf16=True)
    max_err = float(jnp.max(jnp.abs(out - ref)))
    assert jnp.allclose(out, ref, atol=2e-3, rtol=2e-3), (
        f"mismatch vs bf16-mirrored reference (max abs err {max_err})")

    print("KERNEL_OK")
</pallas_src>

<mosaic_0001>
module attributes {stable_mosaic.version = 11 : i64} {
  func.func @_probe(%arg0: memref<8x128xf32, #tpu.memory_space<vmem>>, %arg1: memref<8x128xf32, #tpu.memory_space<vmem>>) attributes {dimension_semantics = [], scalar_prefetch = 0 : i64, scratch_operands = 0 : i64, tpu.core_type = #tpu.core_type<tc>} {
    %c0 = arith.constant 0 : index
    %c0_0 = arith.constant 0 : index
    %0 = vector.load %arg0[%c0, %c0_0] : memref<8x128xf32, #tpu.memory_space<vmem>>, vector<8x128xf32>
    %c1_i32 = arith.constant 1 : i32
    %1 = tpu.dynamic_rotate %0 by %c1_i32 dim 1 : vector<8x128xf32>, i32 -> vector<8x128xf32>
    %c0_1 = arith.constant 0 : index
    %c0_2 = arith.constant 0 : index
    %2 = vector.load %arg1[%c0_1, %c0_2] : memref<8x128xf32, #tpu.memory_space<vmem>>, vector<8x128xf32>
    tpu.vector_store %arg1[%c0_1, %c0_2], %1 {strides = array<i32>} : memref<8x128xf32, #tpu.memory_space<vmem>>, vector<8x128xf32>,
    return
  }
}

</mosaic_0001>

<llo_original>
// kernel: tpu_custom_call.1
$region0: #{tpu_custom_call.1}
  #allocation0 [shape = 'u32[]', space=smem, size = 0x4, offset = 0x4, fixed_abs, tag = 'smem constant byte address 0x4 - core index']
  #allocation1 [shape = 'u32[72,128]{1,0:T(1,128)}', space=vmem, size = 0x9000, scoped, tag = 'internal scratch']
  %s0 = inlined_call_operand.hbm [shape: f32[8,128], index: 0, kind: input, shape index: {}]
  %s1 = inlined_call_operand.hbm [shape: f32[8,128], index: 1, kind: output, shape index: {}]
  %s2 = sld [smem:[#allocation0]]
  $region18: #{tpu_custom_call.1} parent=0
    _
  %s4 = ssub.s32 1, %s2
  %s5 = scalar_select 0, %s4, %s2
  $region1: #{tpu_custom_call.1} parent=0
    #allocation2 [shape = 'u8[4096]{0}', space=vmem, size = 0x1000, scoped, tag = 'input window, operand 0, single buffered']
    #allocation3 [shape = 's32[1]{0}', space=sflag, size = 0x4, scoped, tag = 'scoped memory for tpu_custom_call.1']
    #allocation4 [shape = 's32[1]{0}', space=sflag, size = 0x4, scoped, tag = 'scoped memory for tpu_custom_call.1']
    #allocation5 [shape = 'u8[4096]{0}', space=vmem, size = 0x1000, scoped, tag = 'output window, operand 0, single buffered']
    %6 = vsyncpa [#allocation3], 0
    %7 = vsyncpa [#allocation4], 0
    // Predicated region
    $region2: #{tpu_custom_call.1} parent=1 // pred_check
      _
    $region3: #{tpu_custom_call.1} parent=1 // pred_check_branch
      %9 = sbr.rel (0) target = $region5
    $region4: #{tpu_custom_call.1} parent=1 // pred_region
      %11 = vsyncadd [#allocation3], 0
      %s13 = sshll.u32 %s0, 4
      %s14 = int_to_ptr.hbm [resolvable:$true] %s13
      %s15 = sshll.u32 [#allocation2], 4
      %s16 = int_to_ptr.vmem [resolvable:$true] %s15
      %18 = dma.hbm_to_vmem [thread:$0]  %s14, 128, %s16, [#allocation3]
    $region5: #{tpu_custom_call.1} parent=1 // pred_fallthru
      _
    // Predicated region
    $region6: #{tpu_custom_call.1} parent=1 // pred_check
      _
    $region7: #{tpu_custom_call.1} parent=1 // pred_check_branch
      %20 = sbr.rel (0) target = $region9
    $region8: #{tpu_custom_call.1} parent=1 // pred_region
      %22 = dma.done [#allocation3], 128
    $region9: #{tpu_custom_call.1} parent=1 // pred_fallthru
      _
    %v23 = vld [vmem:[#allocation2] sm:$0xff]
    %24 = vrot.lane.b32.xlu0 %v23, 1
    %v25 = vpop.permute.xlu0 %24
    %26 = vst [vmem:[#allocation5] sm:$0xff] %v25
    // Predicated region
    $region10: #{tpu_custom_call.1} parent=1 // pred_check
      _
    $region11: #{tpu_custom_call.1} parent=1 // pred_check_branch
      %28 = sbr.rel (0) target = $region13
    $region12: #{tpu_custom_call.1} parent=1 // pred_region
      %30 = vsyncadd [#allocation4], 0
      %s32 = sshll.u32 [#allocation5], 4
      %s33 = int_to_ptr.vmem [resolvable:$true] %s32
      %s34 = sshll.u32 %s1, 4
      %s35 = int_to_ptr.hbm [resolvable:$true] %s34
      %37 = dma.vmem_to_hbm [thread:$0]  %s33, 128, %s35, [#allocation4]
    $region13: #{tpu_custom_call.1} parent=1 // pred_fallthru
      _
    // Predicated region
    $region14: #{tpu_custom_call.1} parent=1 // pred_check
      _
    $region15: #{tpu_custom_call.1} parent=1 // pred_check_branch
      %39 = sbr.rel (0) target = $region17
    $region16: #{tpu_custom_call.1} parent=1 // pred_region
      %41 = dma.done [#allocation4], 128
    $region17: #{tpu_custom_call.1} parent=1 // pred_fallthru
      _
    %42 = vsyncpa [#allocation3], 1
    %43 = vsyncpa [#allocation4], 1

</llo_original>
